<compile_context>
chip_gen: v7x
topology: tpu7x:2x2x1
jax: 0.10.0
libtpu: 0.0.40
codegen_flags: <defaults>
</compile_context>

<pallas_src>
import functools

import jax
import jax.numpy as jnp
from jax.experimental import pallas as pl
from jax.experimental.pallas import tpu as pltpu

MIB = 1024 * 1024


# ---------------------------------------------------------------------------
# Small helpers
# ---------------------------------------------------------------------------
def _round_up(x, m):
    return ((x + m - 1) // m) * m


def _pad2(x, rows, cols):
    r, c = x.shape
    return jnp.pad(x, ((0, rows - r), (0, cols - c)))


def _vmem_capacity_bytes():
    """Per-core VMEM capacity; conservative 64 MiB (v7x) fallback if query fails."""
    try:
        cap = int(getattr(pltpu.get_tpu_info(), "vmem_capacity_bytes"))
        if cap > 0:
            return cap
    except Exception:
        pass
    return 64 * MIB


def _vmem_limit_bytes(cap):
    # ~48 MiB scoped limit on v7x (64 MiB physical), ~100 MiB on v5e/v6e (128 MiB).
    return max(32 * MIB, min(int(0.8 * cap), cap - 16 * MIB))


def _choose_tiles(n, fin_p, fout_lane, budget):
    """Pick (npad, tm, tk, h_resident) for the reduction-tiled per-layer kernel."""
    npad = _round_up(n, 128) if n <= 512 else _round_up(n, 512)
    tm_cands = [t for t in (1024, 512, 256, 128) if npad % t == 0]
    tk_cands = [t for t in (8192, 4096, 2048, 1024, 512, 256, 128) if npad % t == 0]
    h_resident = (2 * npad * fin_p * 2) <= min(8 * MIB, budget // 4)

    def footprint(tm, tk):
        a = 2 * tm * tk * 2                                        # A tile, double buf, bf16
        hk = (2 * npad * fin_p * 2) if h_resident else (2 * tk * fin_p * 2)
        hi = 2 * tm * fin_p * 2                                    # self-term rows
        acc = tm * fin_p * 4                                       # f32 accumulator scratch
        out = 2 * tm * fout_lane * 4                               # worst case f32 output
        wts = 6 * fin_p * fout_lane * 4                            # resident weights/bias
        return a + hk + hi + acc + out + wts

    best = None
    for tm in tm_cands:
        for tk in tk_cands:
            if footprint(tm, tk) > budget:
                continue
            # prefer >=2 row blocks (v7x megacore), then the largest reduction tile
            # (biggest A DMAs / fewest grid steps), then the largest row tile.
            key = (npad // tm >= 2, tk, tm)
            if best is None or key > best[1]:
                best = ((tm, tk), key)
    tm, tk = best[0] if best is not None else (tm_cands[-1], tk_cands[-1])
    return npad, tm, tk, h_resident


# ---------------------------------------------------------------------------
# Kernel A: fully fused net for small/medium graphs (A resident in VMEM,
# read from HBM exactly once for ALL layers + the predict head).
# ---------------------------------------------------------------------------
def _make_fused_net_kernel(n_layers, has_head):
    def kernel(*refs):
        a_ref, h_ref = refs[0], refs[1]
        idx = 2
        layer_refs = []
        for _ in range(n_layers):
            layer_refs.append(refs[idx:idx + 3])
            idx += 3
        if has_head:
            wp_ref, bp_ref = refs[idx], refs[idx + 1]
            idx += 2
        o_ref = refs[idx]

        a = a_ref[...]                       # (Npad, Npad) bf16, VMEM resident
        h = h_ref[...]                       # (Npad, F0_p)  bf16
        for (ws_ref, wn_ref, b_ref) in layer_refs:
            # mean aggregation on the MXU, f32 accumulation
            agg = jnp.dot(a, h, preferred_element_type=jnp.float32)
            neigh = jnp.dot(agg, wn_ref[...], preferred_element_type=jnp.float32)
            self_t = jnp.dot(h, ws_ref[...], preferred_element_type=jnp.float32)
            # activation = relu ; dropout = identity (eval mode)
            h = jnp.maximum(self_t + neigh + b_ref[...], 0.0).astype(jnp.bfloat16)
        if has_head:
            out = jnp.dot(h, wp_ref[...], preferred_element_type=jnp.float32) + bp_ref[...]
        else:
            out = h.astype(jnp.float32)
        o_ref[...] = out

    return kernel


# ---------------------------------------------------------------------------
# Kernel B: one SAGEConv(mean)+ReLU layer, reduction-tiled over neighbor rows,
# with an optional fused predict head in the finalize branch.
# ---------------------------------------------------------------------------
def _make_layer_kernel(fuse_head, h_resident, tk):
    def kernel(*refs):
        if fuse_head:
            (a_ref, hk_ref, hi_ref, ws_ref, wn_ref, b_ref,
             wp_ref, bp_ref, o_ref, acc_ref) = refs
        else:
            (a_ref, hk_ref, hi_ref, ws_ref, wn_ref, b_ref,
             o_ref, acc_ref) = refs

        k = pl.program_id(1)

        @pl.when(k == 0)
        def _():
            acc_ref[...] = jnp.zeros_like(acc_ref)

        if h_resident:
            start = pl.multiple_of(k * tk, 128)
            h_blk = hk_ref[pl.ds(start, tk), :]        # slice VMEM-resident H
        else:
            h_blk = hk_ref[...]                        # k-streamed H tile

        # partial mean aggregation: (TM, TK) @ (TK, Fin_p) -> f32 accumulator
        acc_ref[...] += jnp.dot(a_ref[...], h_blk,
                                preferred_element_type=jnp.float32)

        @pl.when(k == pl.num_programs(1) - 1)
        def _():
            # f32 finalize matmul: no bf16 re-round of the accumulator
            neigh = jnp.dot(acc_ref[...], wn_ref[...],
                            preferred_element_type=jnp.float32)
            self_t = jnp.dot(hi_ref[...], ws_ref[...],
                             preferred_element_type=jnp.float32)
            # activation = relu ; dropout = identity (eval mode)
            out = jnp.maximum(self_t + neigh + b_ref[...], 0.0)
            if fuse_head:
                out = jnp.dot(out.astype(jnp.bfloat16), wp_ref[...],
                              preferred_element_type=jnp.float32) + bp_ref[...]
            o_ref[...] = out.astype(o_ref.dtype)

    return kernel


def _sage_layer(a_p, h, ws, wn, b, head, *, tm, tk, h_resident, vmem_limit):
    npad, fin_p = h.shape
    fout_p = ws.shape[1]
    grid = (npad // tm, npad // tk)

    if h_resident:
        hk_spec = pl.BlockSpec((npad, fin_p), lambda i, k: (0, 0))   # fetched once
    else:
        hk_spec = pl.BlockSpec((tk, fin_p), lambda i, k: (k, 0))

    in_specs = [
        pl.BlockSpec((tm, tk), lambda i, k: (i, k)),            # A tile (dominant stream)
        hk_spec,                                                # H rows for aggregation
        pl.BlockSpec((tm, fin_p), lambda i, k: (i, 0)),         # H rows for self term
        pl.BlockSpec((fin_p, fout_p), lambda i, k: (0, 0)),     # W_self (resident, bf16)
        pl.BlockSpec((fin_p, fout_p), lambda i, k: (0, 0)),     # W_neigh (resident, f32)
        pl.BlockSpec((1, fout_p), lambda i, k: (0, 0)),         # bias (finalize only)
    ]
    args = [a_p, h, h, ws, wn, b]

    if head is not None:
        wp, bp = head
        c_p = wp.shape[1]
        in_specs += [pl.BlockSpec((fout_p, c_p), lambda i, k: (0, 0)),
                     pl.BlockSpec((1, c_p), lambda i, k: (0, 0))]
        args += [wp, bp]
        out_f, out_dtype = c_p, jnp.float32
    else:
        out_f, out_dtype = fout_p, jnp.bfloat16     # bf16 feeds the next layer's MXU

    return pl.pallas_call(
        _make_layer_kernel(head is not None, h_resident, tk),
        out_shape=jax.ShapeDtypeStruct((npad, out_f), out_dtype),
        grid=grid,
        in_specs=in_specs,
        out_specs=pl.BlockSpec((tm, out_f), lambda i, k: (i, 0)),
        scratch_shapes=[pltpu.VMEM((tm, fin_p), jnp.float32)],
        compiler_params=pltpu.CompilerParams(
            dimension_semantics=("parallel", "arbitrary"),
            vmem_limit_bytes=vmem_limit,
        ),
    )(*args)


# ---------------------------------------------------------------------------
# Full NET.forward (mini_batch=False, edge_weight=None, eval-mode dropout)
# ---------------------------------------------------------------------------
@functools.partial(jax.jit,
                   static_argnames=("force_tiled", "tile_override", "h_resident_override"))
def sage_net_forward(a_norm, x, params, *, force_tiled=False,
                     tile_override=None, h_resident_override=None):
    n, fin = x.shape
    layers = params["layers"]
    head = params.get("predict")
    n_layers = len(layers)

    cap = _vmem_capacity_bytes()
    vmem_limit = _vmem_limit_bytes(cap)
    budget = int(0.75 * vmem_limit)

    dims = [fin] + [w.shape[1] for (w, _, _) in layers]
    dims_p = [_round_up(d, 128) for d in dims]
    c_p = _round_up(head[0].shape[1], 128) if head is not None else 0
    fin_p_max = max(dims_p[:-1])
    fout_lane_max = max(dims_p[1:] + ([c_p] if head is not None else []))

    # ---- Path 1: fully fused (A resident in VMEM across all layers) ----
    npad_f = _round_up(n, 128)
    f_all_p = max(dims_p + ([c_p] if head is not None else []))
    fused_fp = (npad_f * npad_f * 2            # A bf16
                + 4 * npad_f * f_all_p * 4     # H / agg / out temporaries
                + 8 * f_all_p * f_all_p * 4)   # weights
    use_fused = (not force_tiled) and npad_f <= 2048 and fused_fp <= int(0.7 * vmem_limit)

    if use_fused:
        a_p = _pad2(a_norm, npad_f, npad_f).astype(jnp.bfloat16)
        h0 = _pad2(x, npad_f, dims_p[0]).astype(jnp.bfloat16)
        wargs = []
        for (w_self, w_neigh, b) in layers:
            fi_p = _round_up(w_self.shape[0], 128)
            fo_p = _round_up(w_self.shape[1], 128)
            wargs += [_pad2(w_self, fi_p, fo_p).astype(jnp.bfloat16),
                      _pad2(w_neigh, fi_p, fo_p).astype(jnp.float32),
                      _pad2(b, 1, fo_p).astype(jnp.float32)]
        if head is not None:
            w_p, b_p = head
            wargs += [_pad2(w_p, dims_p[-1], c_p).astype(jnp.bfloat16),
                      _pad2(b_p, 1, c_p).astype(jnp.float32)]
            out_f = c_p
        else:
            out_f = dims_p[-1]

        out = pl.pallas_call(
            _make_fused_net_kernel(n_layers, head is not None),
            out_shape=jax.ShapeDtypeStruct((npad_f, out_f), jnp.float32),
            compiler_params=pltpu.CompilerParams(vmem_limit_bytes=vmem_limit),
        )(a_p, h0, *wargs)

        if head is not None:
            return out[:n, :head[0].shape[1]]
        return out[:n, :dims[-1]]

    # ---- Path 2: per-layer reduction-tiled kernel (large graphs) ----
    npad, tm, tk, h_resident = _choose_tiles(n, fin_p_max, fout_lane_max, budget)
    if tile_override is not None:
        tm, tk = tile_override
        npad = _round_up(n, max(tm, tk))     # tiles are powers of two -> lcm == max
        h_resident = (2 * npad * fin_p_max * 2) <= min(8 * MIB, budget // 4)
    if h_resident_override is not None:
        h_resident = bool(h_resident_override)

    a_p = _pad2(a_norm, npad, npad).astype(jnp.bfloat16)      # cast once, reused per layer
    h = _pad2(x, npad, dims_p[0]).astype(jnp.bfloat16)

    for l, (w_self, w_neigh, b) in enumerate(layers):
        fi_p = _round_up(w_self.shape[0], 128)
        fo_p = _round_up(w_self.shape[1], 128)
        ws = _pad2(w_self, fi_p, fo_p).astype(jnp.bfloat16)
        wn = _pad2(w_neigh, fi_p, fo_p).astype(jnp.float32)
        bb = _pad2(b, 1, fo_p).astype(jnp.float32)

        head_args = None
        if head is not None and l == n_layers - 1:
            w_p, b_p = head
            head_args = (_pad2(w_p, fo_p, c_p).astype(jnp.bfloat16),
                         _pad2(b_p, 1, c_p).astype(jnp.float32))

        h = _sage_layer(a_p, h, ws, wn, bb, head_args,
                        tm=tm, tk=tk, h_resident=h_resident, vmem_limit=vmem_limit)

    if head is not None:
        return h[:n, :head[0].shape[1]].astype(jnp.float32)
    return h[:n, :dims[-1]].astype(jnp.float32)


# ---------------------------------------------------------------------------
# Pure-JAX f32 reference (same math, no padding / bf16)
# ---------------------------------------------------------------------------
def reference_forward(a_norm, x, params):
    h = x
    for (w_self, w_neigh, b) in params["layers"]:
        h_neigh = a_norm @ h
        h = jnp.maximum(h @ w_self + h_neigh @ w_neigh + b, 0.0)
    if params.get("predict") is not None:
        w_p, b_p = params["predict"]
        h = h @ w_p + b_p
    return h


# ---------------------------------------------------------------------------
# Deterministic parameter / input construction
# ---------------------------------------------------------------------------
def init_params(key, in_feats, n_hidden, n_layers, n_classes):
    params = {"layers": [], "predict": None}
    dims = [in_feats] + [n_hidden] * n_layers
    for l in range(n_layers):
        key, k1, k2, k3 = jax.random.split(key, 4)
        fi, fo = dims[l], dims[l + 1]
        scale = 1.0 / jnp.sqrt(jnp.float32(fi))
        w_self = jax.random.uniform(k1, (fi, fo), jnp.float32, -scale, scale)
        w_neigh = jax.random.uniform(k2, (fi, fo), jnp.float32, -scale, scale)
        b = jax.random.uniform(k3, (1, fo), jnp.float32, -scale, scale)
        params["layers"].append((w_self, w_neigh, b))
    if n_classes is not None:
        key, k1, k2 = jax.random.split(key, 3)
        scale = 1.0 / jnp.sqrt(jnp.float32(n_hidden))
        w_p = jax.random.uniform(k1, (n_hidden, n_classes), jnp.float32, -scale, scale)
        b_p = jax.random.uniform(k2, (1, n_classes), jnp.float32, -scale, scale)
        params["predict"] = (w_p, b_p)
    return params


def build_graph(key, n_nodes, p_edge=0.3):
    """Deterministic random graph -> row-normalized dense adjacency (mean aggregator)."""
    adj = (jax.random.uniform(key, (n_nodes, n_nodes)) < p_edge).astype(jnp.float32)
    adj = adj * (1.0 - jnp.eye(n_nodes, dtype=jnp.float32))   # no self loops
    deg = jnp.maximum(adj.sum(axis=1, keepdims=True), 1.0)    # avoid div-by-zero
    return adj / deg


def _check(out, ref, tag):
    err = float(jnp.max(jnp.abs(out - ref)))
    tol = 0.05 * (1.0 + float(jnp.max(jnp.abs(ref))))
    assert err < tol, f"{tag}: numerical mismatch vs f32 reference: {err} (tol {tol})"


# ---------------------------------------------------------------------------
if __name__ == "__main__":
    key = jax.random.PRNGKey(0)
    k_g1, k_x1, k_param, k_g2, k_x2 = jax.random.split(key, 5)

    n_nodes, in_feats, n_hidden, n_layers, n_classes = 16, 8, 32, 2, 4
    params = init_params(k_param, in_feats, n_hidden, n_layers, n_classes)

    # --- Test 1: small graph -> fully fused single-kernel path (A resident in VMEM)
    a1 = build_graph(k_g1, n_nodes)
    x1 = jax.random.normal(k_x1, (n_nodes, in_feats), jnp.float32)
    out1 = sage_net_forward(a1, x1, params)
    jax.block_until_ready(out1)
    assert out1.shape == (n_nodes, n_classes), out1.shape
    _check(out1, reference_forward(a1, x1, params), "fused path")

    # --- Test 2: force the reduction-tiled path (multi row-tile, multi k-tile, resident H)
    n2 = 520
    a2 = build_graph(k_g2, n2)
    x2 = jax.random.normal(k_x2, (n2, in_feats), jnp.float32)
    out2 = sage_net_forward(a2, x2, params, force_tiled=True, tile_override=(256, 512))
    jax.block_until_ready(out2)
    assert out2.shape == (n2, n_classes), out2.shape
    ref2 = reference_forward(a2, x2, params)
    _check(out2, ref2, "tiled path (resident H)")

    # --- Test 3: tiled path with k-streamed (non-resident) H blocks
    out3 = sage_net_forward(a2, x2, params, force_tiled=True,
                            tile_override=(256, 512), h_resident_override=False)
    jax.block_until_ready(out3)
    _check(out3, ref2, "tiled path (streamed H)")

    print("KERNEL_OK")
</pallas_src>

<mosaic_0001>
module attributes {stable_mosaic.version = 11 : i64} {
  func.func @kernel(%arg0: memref<128x128xbf16, #tpu.memory_space<vmem>>, %arg1: memref<128x128xbf16, #tpu.memory_space<vmem>>, %arg2: memref<128x128xbf16, #tpu.memory_space<vmem>>, %arg3: memref<128x128xf32, #tpu.memory_space<vmem>>, %arg4: memref<1x128xf32, #tpu.memory_space<vmem>>, %arg5: memref<128x128xbf16, #tpu.memory_space<vmem>>, %arg6: memref<128x128xf32, #tpu.memory_space<vmem>>, %arg7: memref<1x128xf32, #tpu.memory_space<vmem>>, %arg8: memref<128x128xbf16, #tpu.memory_space<vmem>>, %arg9: memref<1x128xf32, #tpu.memory_space<vmem>>, %arg10: memref<128x128xf32, #tpu.memory_space<vmem>>) attributes {dimension_semantics = [], scalar_prefetch = 0 : i64, scratch_operands = 0 : i64, tpu.core_type = #tpu.core_type<tc>} {
    %c0 = arith.constant 0 : index
    %c0_0 = arith.constant 0 : index
    %0 = vector.load %arg0[%c0, %c0_0] : memref<128x128xbf16, #tpu.memory_space<vmem>>, vector<128x128xbf16>
    %c0_1 = arith.constant 0 : index
    %c0_2 = arith.constant 0 : index
    %1 = vector.load %arg1[%c0_1, %c0_2] : memref<128x128xbf16, #tpu.memory_space<vmem>>, vector<128x128xbf16>
    %cst = arith.constant dense<0.000000e+00> : vector<128x128xf32>
    %2 = tpu.matmul %0, %1, %cst {dimension_numbers = #tpu.dot_dimension_numbers<[1], [0], [0], [1], [0, 0, 1, 1], [], []>} : vector<128x128xbf16>, vector<128x128xbf16>, vector<128x128xf32> -> vector<128x128xf32>
    %c0_3 = arith.constant 0 : index
    %c0_4 = arith.constant 0 : index
    %3 = vector.load %arg3[%c0_3, %c0_4] : memref<128x128xf32, #tpu.memory_space<vmem>>, vector<128x128xf32>
    %cst_5 = arith.constant dense<0.000000e+00> : vector<128x128xf32>
    %4 = tpu.matmul %2, %3, %cst_5 {dimension_numbers = #tpu.dot_dimension_numbers<[1], [0], [0], [1], [0, 0, 1, 1], [], []>} : vector<128x128xf32>, vector<128x128xf32>, vector<128x128xf32> -> vector<128x128xf32>
    %c0_6 = arith.constant 0 : index
    %c0_7 = arith.constant 0 : index
    %5 = vector.load %arg2[%c0_6, %c0_7] : memref<128x128xbf16, #tpu.memory_space<vmem>>, vector<128x128xbf16>
    %cst_8 = arith.constant dense<0.000000e+00> : vector<128x128xf32>
    %6 = tpu.matmul %1, %5, %cst_8 {dimension_numbers = #tpu.dot_dimension_numbers<[1], [0], [0], [1], [0, 0, 1, 1], [], []>} : vector<128x128xbf16>, vector<128x128xbf16>, vector<128x128xf32> -> vector<128x128xf32>
    %7 = arith.addf %6, %4 : vector<128x128xf32>
    %c0_9 = arith.constant 0 : index
    %c0_10 = arith.constant 0 : index
    %8 = vector.load %arg4[%c0_9, %c0_10] : memref<1x128xf32, #tpu.memory_space<vmem>>, vector<1x128xf32>
    %9 = vector.broadcast %8 : vector<1x128xf32> to vector<128x128xf32>
    %10 = arith.addf %7, %9 : vector<128x128xf32>
    %cst_11 = arith.constant 0.000000e+00 : f32
    %11 = vector.broadcast %cst_11 : f32 to vector<128x128xf32>
    %12 = arith.maximumf %10, %11 : vector<128x128xf32>
    %13 = arith.truncf %12 : vector<128x128xf32> to vector<128x128xbf16>
    %cst_12 = arith.constant dense<0.000000e+00> : vector<128x128xf32>
    %14 = tpu.matmul %0, %13, %cst_12 {dimension_numbers = #tpu.dot_dimension_numbers<[1], [0], [0], [1], [0, 0, 1, 1], [], []>} : vector<128x128xbf16>, vector<128x128xbf16>, vector<128x128xf32> -> vector<128x128xf32>
    %c0_13 = arith.constant 0 : index
    %c0_14 = arith.constant 0 : index
    %15 = vector.load %arg6[%c0_13, %c0_14] : memref<128x128xf32, #tpu.memory_space<vmem>>, vector<128x128xf32>
    %cst_15 = arith.constant dense<0.000000e+00> : vector<128x128xf32>
    %16 = tpu.matmul %14, %15, %cst_15 {dimension_numbers = #tpu.dot_dimension_numbers<[1], [0], [0], [1], [0, 0, 1, 1], [], []>} : vector<128x128xf32>, vector<128x128xf32>, vector<128x128xf32> -> vector<128x128xf32>
    %c0_16 = arith.constant 0 : index
    %c0_17 = arith.constant 0 : index
    %17 = vector.load %arg5[%c0_16, %c0_17] : memref<128x128xbf16, #tpu.memory_space<vmem>>, vector<128x128xbf16>
    %cst_18 = arith.constant dense<0.000000e+00> : vector<128x128xf32>
    %18 = tpu.matmul %13, %17, %cst_18 {dimension_numbers = #tpu.dot_dimension_numbers<[1], [0], [0], [1], [0, 0, 1, 1], [], []>} : vector<128x128xbf16>, vector<128x128xbf16>, vector<128x128xf32> -> vector<128x128xf32>
    %19 = arith.addf %18, %16 : vector<128x128xf32>
    %c0_19 = arith.constant 0 : index
    %c0_20 = arith.constant 0 : index
    %20 = vector.load %arg7[%c0_19, %c0_20] : memref<1x128xf32, #tpu.memory_space<vmem>>, vector<1x128xf32>
    %21 = vector.broadcast %20 : vector<1x128xf32> to vector<128x128xf32>
    %22 = arith.addf %19, %21 : vector<128x128xf32>
    %cst_21 = arith.constant 0.000000e+00 : f32
    %23 = vector.broadcast %cst_21 : f32 to vector<128x128xf32>
    %24 = arith.maximumf %22, %23 : vector<128x128xf32>
    %25 = arith.truncf %24 : vector<128x128xf32> to vector<128x128xbf16>
    %c0_22 = arith.constant 0 : index
    %c0_23 = arith.constant 0 : index
    %26 = vector.load %arg8[%c0_22, %c0_23] : memref<128x128xbf16, #tpu.memory_space<vmem>>, vector<128x128xbf16>
    %cst_24 = arith.constant dense<0.000000e+00> : vector<128x128xf32>
    %27 = tpu.matmul %25, %26, %cst_24 {dimension_numbers = #tpu.dot_dimension_numbers<[1], [0], [0], [1], [0, 0, 1, 1], [], []>} : vector<128x128xbf16>, vector<128x128xbf16>, vector<128x128xf32> -> vector<128x128xf32>
    %c0_25 = arith.constant 0 : index
    %c0_26 = arith.constant 0 : index
    %28 = vector.load %arg9[%c0_25, %c0_26] : memref<1x128xf32, #tpu.memory_space<vmem>>, vector<1x128xf32>
    %29 = vector.broadcast %28 : vector<1x128xf32> to vector<128x128xf32>
    %30 = arith.addf %27, %29 : vector<128x128xf32>
    %c0_27 = arith.constant 0 : index
    %c0_28 = arith.constant 0 : index
    %31 = vector.load %arg10[%c0_27, %c0_28] : memref<128x128xf32, #tpu.memory_space<vmem>>, vector<128x128xf32>
    tpu.vector_store %arg10[%c0_27, %c0_28], %30 {strides = array<i32>} : memref<128x128xf32, #tpu.memory_space<vmem>>, vector<128x128xf32>,
    return
  }
}

</mosaic_0001>

<llo_original>
// kernel: sage_net_forward.1
$region0: #{sage_net_forward.1}
  #allocation0 [shape = 'u32[]', space=smem, size = 0x4, offset = 0x4, fixed_abs, tag = 'smem constant byte address 0x4 - core index']
  #allocation1 [shape = 'u32[144,128]{1,0:T(1,128)}', space=vmem, size = 0x12000, scoped, tag = 'internal scratch']
  %s0 = inlined_call_operand.vmem [shape: bf16[128,128], index: 0, kind: input, shape index: {}]
  %s1 = inlined_call_operand.vmem [shape: bf16[128,128], index: 1, kind: input, shape index: {}]
  %s2 = inlined_call_operand.vmem [shape: bf16[128,128], index: 2, kind: input, shape index: {}]
  %s3 = inlined_call_operand.vmem [shape: f32[128,128], index: 3, kind: input, shape index: {}]
  %s4 = inlined_call_operand.vmem [shape: f32[1,128], index: 4, kind: input, shape index: {}]
  %s5 = inlined_call_operand.vmem [shape: bf16[128,128], index: 5, kind: input, shape index: {}]
  %s6 = inlined_call_operand.vmem [shape: f32[128,128], index: 6, kind: input, shape index: {}]
  %s7 = inlined_call_operand.vmem [shape: f32[1,128], index: 7, kind: input, shape index: {}]
  %s8 = inlined_call_operand.vmem [shape: bf16[128,128], index: 8, kind: input, shape index: {}]
  %s9 = inlined_call_operand.vmem [shape: f32[1,128], index: 9, kind: input, shape index: {}]
  %s10 = inlined_call_operand.vmem [shape: f32[128,128], index: 10, kind: output, shape index: {}]
  %s11 = sld [smem:[#allocation0]]
  $region50: #{sage_net_forward.1} parent=0
    _
  %s13 = ssub.s32 1, %s11
  %s14 = scalar_select 0, %s13, %s11
  // Predicated region
  $region2: #{sage_net_forward.1} parent=0 // pred_check
    _
  $region3: #{sage_net_forward.1} parent=0 // pred_check_branch
    %16 = sbr.rel (0) target = $region5
  $region4: #{sage_net_forward.1} parent=0 // pred_region
    _
  $region5: #{sage_net_forward.1} parent=0 // pred_fallthru
    _
  // Predicated region
  $region6: #{sage_net_forward.1} parent=0 // pred_check
    _
  $region7: #{sage_net_forward.1} parent=0 // pred_check_branch
    %18 = sbr.rel (0) target = $region9
  $region8: #{sage_net_forward.1} parent=0 // pred_region
    _
  $region9: #{sage_net_forward.1} parent=0 // pred_fallthru
    _
  // Predicated region
  $region10: #{sage_net_forward.1} parent=0 // pred_check
    _
  $region11: #{sage_net_forward.1} parent=0 // pred_check_branch
    %20 = sbr.rel (0) target = $region13
  $region12: #{sage_net_forward.1} parent=0 // pred_region
    _
  $region13: #{sage_net_forward.1} parent=0 // pred_fallthru
    _
  // Predicated region
  $region14: #{sage_net_forward.1} parent=0 // pred_check
    _
  $region15: #{sage_net_forward.1} parent=0 // pred_check_branch
    %22 = sbr.rel (0) target = $region17
  $region16: #{sage_net_forward.1} parent=0 // pred_region
    _
  $region17: #{sage_net_forward.1} parent=0 // pred_fallthru
    _
  // Predicated region
  $region18: #{sage_net_forward.1} parent=0 // pred_check
    _
  $region19: #{sage_net_forward.1} parent=0 // pred_check_branch
    %24 = sbr.rel (0) target = $region21
  $region20: #{sage_net_forward.1} parent=0 // pred_region
    _
  $region21: #{sage_net_forward.1} parent=0 // pred_fallthru
    _
  // Predicated region
  $region22: #{sage_net_forward.1} parent=0 // pred_check
    _
  $region23: #{sage_net_forward.1} parent=0 // pred_check_branch
    %26 = sbr.rel (0) target = $region25
  $region24: #{sage_net_forward.1} parent=0 // pred_region
    _
  $region25: #{sage_net_forward.1} parent=0 // pred_fallthru
    _
  // Predicated region
  $region26: #{sage_net_forward.1} parent=0 // pred_check
    _
  $region27: #{sage_net_forward.1} parent=0 // pred_check_branch
    %28 = sbr.rel (0) target = $region29
  $region28: #{sage_net_forward.1} parent=0 // pred_region
    _
  $region29: #{sage_net_forward.1} parent=0 // pred_fallthru
    _
  // Predicated region
  $region30: #{sage_net_forward.1} parent=0 // pred_check
    _
  $region31: #{sage_net_forward.1} parent=0 // pred_check_branch
    %30 = sbr.rel (0) target = $region33
  $region32: #{sage_net_forward.1} parent=0 // pred_region
    _
  $region33: #{sage_net_forward.1} parent=0 // pred_fallthru
    _
  // Predicated region
  $region34: #{sage_net_forward.1} parent=0 // pred_check
    _
  $region35: #{sage_net_forward.1} parent=0 // pred_check_branch
    %32 = sbr.rel (0) target = $region37
  $region36: #{sage_net_forward.1} parent=0 // pred_region
    _
  $region37: #{sage_net_forward.1} parent=0 // pred_fallthru
    _
  // Predicated region
  $region38: #{sage_net_forward.1} parent=0 // pred_check
    _
  $region39: #{sage_net_forward.1} parent=0 // pred_check_branch
    %34 = sbr.rel (0) target = $region41
  $region40: #{sage_net_forward.1} parent=0 // pred_region
    _
  $region41: #{sage_net_forward.1} parent=0 // pred_fallthru
    _
  %v36 = vld [vmem:[%s0] sm:$0xf]
  %v37 = vld [vmem:[%s0 + $0x4] sm:$0xf]
  %v38 = vld [vmem:[%s0 + $0x8] sm:$0xf]
  %v39 = vld [vmem:[%s0 + $0xc] sm:$0xf]
  %v40 = vld [vmem:[%s0 + $0x10] sm:$0xf]
  %v41 = vld [vmem:[%s0 + $0x14] sm:$0xf]
  %v42 = vld [vmem:[%s0 + $0x18] sm:$0xf]
  %v43 = vld [vmem:[%s0 + $0x1c] sm:$0xf]
  %v44 = vld [vmem:[%s0 + $0x20] sm:$0xf]
  %v45 = vld [vmem:[%s0 + $0x24] sm:$0xf]
  %v46 = vld [vmem:[%s0 + $0x28] sm:$0xf]
  %v47 = vld [vmem:[%s0 + $0x2c] sm:$0xf]
  %v48 = vld [vmem:[%s0 + $0x30] sm:$0xf]
  %v49 = vld [vmem:[%s0 + $0x34] sm:$0xf]
  %v50 = vld [vmem:[%s0 + $0x38] sm:$0xf]
  %v51 = vld [vmem:[%s0 + $0x3c] sm:$0xf]
  %v52 = vld [vmem:[%s1] sm:$0xf]
  %v53 = vld [vmem:[%s1 + $0x4] sm:$0xf]
  %v54 = vld [vmem:[%s1 + $0x8] sm:$0xf]
  %v55 = vld [vmem:[%s1 + $0xc] sm:$0xf]
  %v56 = vld [vmem:[%s1 + $0x10] sm:$0xf]
  %v57 = vld [vmem:[%s1 + $0x14] sm:$0xf]
  %v58 = vld [vmem:[%s1 + $0x18] sm:$0xf]
  %v59 = vld [vmem:[%s1 + $0x1c] sm:$0xf]
  %v60 = vld [vmem:[%s1 + $0x20] sm:$0xf]
  %v61 = vld [vmem:[%s1 + $0x24] sm:$0xf]
  %v62 = vld [vmem:[%s1 + $0x28] sm:$0xf]
  %v63 = vld [vmem:[%s1 + $0x2c] sm:$0xf]
  %v64 = vld [vmem:[%s1 + $0x30] sm:$0xf]
  %v65 = vld [vmem:[%s1 + $0x34] sm:$0xf]
  %v66 = vld [vmem:[%s1 + $0x38] sm:$0xf]
  %v67 = vld [vmem:[%s1 + $0x3c] sm:$0xf]
  %v84 = vunpack.c.l.b16 %v36
  %v85 = vunpack.c.l.b16 %v37
  %v86 = vunpack.c.l.b16 %v38
  %v87 = vunpack.c.l.b16 %v39
  %v88 = vunpack.c.l.b16 %v40
  %v89 = vunpack.c.l.b16 %v41
  %v90 = vunpack.c.l.b16 %v42
  %v91 = vunpack.c.l.b16 %v43
  %v92 = vunpack.c.l.b16 %v44
  %v93 = vunpack.c.l.b16 %v45
  %v94 = vunpack.c.l.b16 %v46
  %v95 = vunpack.c.l.b16 %v47
  %v96 = vunpack.c.l.b16 %v48
  %v97 = vunpack.c.l.b16 %v49
  %v98 = vunpack.c.l.b16 %v50
  %v99 = vunpack.c.l.b16 %v51
  %v100 = vpack.c.b16 %v85, %v84
  %v101 = vpack.c.b16 %v87, %v86
  %v102 = vpack.c.b16 %v89, %v88
  %v103 = vpack.c.b16 %v91, %v90
  %v104 = vpack.c.b16 %v93, %v92
  %v105 = vpack.c.b16 %v95, %v94
  %v106 = vpack.c.b16 %v97, %v96
  %v107 = vpack.c.b16 %v99, %v98
  %v132 = vunpack.c.l.b16 %v52
  %v133 = vunpack.c.l.b16 %v53
  %v134 = vunpack.c.l.b16 %v54
  %v135 = vunpack.c.l.b16 %v55
  %v136 = vunpack.c.l.b16 %v56
  %v137 = vunpack.c.l.b16 %v57
  %v138 = vunpack.c.l.b16 %v58
  %v139 = vunpack.c.l.b16 %v59
  %v140 = vunpack.c.l.b16 %v60
  %v141 = vunpack.c.l.b16 %v61
  %v142 = vunpack.c.l.b16 %v62
  %v143 = vunpack.c.l.b16 %v63
  %v144 = vunpack.c.l.b16 %v64
  %v145 = vunpack.c.l.b16 %v65
  %v146 = vunpack.c.l.b16 %v66
  %v147 = vunpack.c.l.b16 %v67
  %v148 = vpack.c.b16 %v133, %v132
  %v149 = vpack.c.b16 %v135, %v134
  %v150 = vpack.c.b16 %v137, %v136
  %v151 = vpack.c.b16 %v139, %v138
  %v152 = vpack.c.b16 %v141, %v140
  %v153 = vpack.c.b16 %v143, %v142
  %v154 = vpack.c.b16 %v145, %v144
  %v155 = vpack.c.b16 %v147, %v146
  %164 = vmatprep.subr.bf16.mxu0 0
  %165 = vmatpush1.bf16.msra.mxu0 %v148
  %166 = vmatprep.subr.bf16.mxu0 0
  %167 = vmatpush1.bf16.msra.mxu0 %v149
  %168 = vmatprep.subr.bf16.mxu0 0
  %169 = vmatpush1.bf16.msra.mxu0 %v150
  %170 = vmatprep.subr.bf16.mxu0 0
  %171 = vmatpush1.bf16.msra.mxu0 %v151
  %172 = vmatprep.subr.bf16.mxu0 0
  %173 = vmatpush1.bf16.msra.mxu0 %v152
  %174 = vmatprep.subr.bf16.mxu0 0
  %175 = vmatpush1.bf16.msra.mxu0 %v153
  %176 = vmatprep.subr.bf16.mxu0 0
  %177 = vmatpush1.bf16.msra.mxu0 %v154
  %178 = vmatprep.subr.bf16.mxu0 0
  %179 = vmatpush1.bf16.msra.mxu0 %v155
  %180 = vmatprep.subr.bf16.mxu0 0
  %181 = vmatpush1.bf16.msra.mxu0 0
  %182 = vmatprep.subr.bf16.mxu0 0
  %183 = vmatpush1.bf16.msra.mxu0 0
  %184 = vmatprep.subr.bf16.mxu0 0
  %185 = vmatpush1.bf16.msra.mxu0 0
  %186 = vmatprep.subr.bf16.mxu0 0
  %187 = vmatpush1.bf16.msra.mxu0 0
  %188 = vmatprep.subr.bf16.mxu0 0
  %189 = vmatpush1.bf16.msra.mxu0 0
  %190 = vmatprep.subr.bf16.mxu0 0
  %191 = vmatpush1.bf16.msra.mxu0 0
  %192 = vmatprep.subr.bf16.mxu0 0
  %193 = vmatpush1.bf16.msra.mxu0 0
  %194 = vmatprep.subr.bf16.mxu0 0
  %195 = vmatpush1.bf16.msra.mxu0 0
  %196 = vmatprep.mubr.bf16.mxu0 0
  %197 = vmatmul.mubr.bf16.gmra.mrb[0].mxu0 %v100
  %v198 = vpop.f32.mrb[0].mxu0
  %v199 = vadd.f32 0.0, %v198
  %v200 = vpop.f32.mrb[0].mxu0
  %v201 = vpop.f32.mrb[0].mxu0
  %v202 = vadd.f32 0.0, %v201
  %v203 = vpop.f32.mrb[0].mxu0
  %204 = vmatprep.mubr.bf16.mxu0 0
  %205 = vmatmul.mubr.bf16.gmra.mrb[0].mxu0 %v101
  %v206 = vpop.f32.mrb[0].mxu0
  %v207 = vadd.f32 0.0, %v206
  %v208 = vpop.f32.mrb[0].mxu0
  %v209 = vpop.f32.mrb[0].mxu0
  %v210 = vadd.f32 0.0, %v209
  %v211 = vpop.f32.mrb[0].mxu0
  %212 = vmatprep.mubr.bf16.mxu0 0
  %213 = vmatmul.mubr.bf16.gmra.mrb[0].mxu0 %v102
  %v214 = vpop.f32.mrb[0].mxu0
  %v215 = vadd.f32 0.0, %v214
  %v216 = vpop.f32.mrb[0].mxu0
  %v217 = vpop.f32.mrb[0].mxu0
  %v218 = vadd.f32 0.0, %v217
  %v219 = vpop.f32.mrb[0].mxu0
  %220 = vmatprep.mubr.bf16.mxu0 0
  %221 = vmatmul.mubr.bf16.gmra.mrb[0].mxu0 %v103
  %v222 = vpop.f32.mrb[0].mxu0
  %v223 = vadd.f32 0.0, %v222
  %v224 = vpop.f32.mrb[0].mxu0
  %v225 = vpop.f32.mrb[0].mxu0
  %v226 = vadd.f32 0.0, %v225
  %v227 = vpop.f32.mrb[0].mxu0
  %228 = vmatprep.mubr.bf16.mxu0 0
  %229 = vmatmul.mubr.bf16.gmra.mrb[0].mxu0 %v104
  %v230 = vpop.f32.mrb[0].mxu0
  %v231 = vadd.f32 0.0, %v230
  %v232 = vpop.f32.mrb[0].mxu0
  %v233 = vpop.f32.mrb[0].mxu0
  %v234 = vadd.f32 0.0, %v233
  %v235 = vpop.f32.mrb[0].mxu0
  %236 = vmatprep.mubr.bf16.mxu0 0
  %237 = vmatmul.mubr.bf16.gmra.mrb[0].mxu0 %v105
  %v238 = vpop.f32.mrb[0].mxu0
  %v239 = vadd.f32 0.0, %v238
  %v240 = vpop.f32.mrb[0].mxu0
  %v241 = vpop.f32.mrb[0].mxu0
  %v242 = vadd.f32 0.0, %v241
  %v243 = vpop.f32.mrb[0].mxu0
  %244 = vmatprep.mubr.bf16.mxu0 0
  %245 = vmatmul.mubr.bf16.gmra.mrb[0].mxu0 %v106
  %v246 = vpop.f32.mrb[0].mxu0
  %v247 = vadd.f32 0.0, %v246
  %v248 = vpop.f32.mrb[0].mxu0
  %v249 = vpop.f32.mrb[0].mxu0
  %v250 = vadd.f32 0.0, %v249
  %v251 = vpop.f32.mrb[0].mxu0
  %252 = vmatprep.mubr.bf16.mxu0 0
  %253 = vmatmul.mubr.bf16.gmra.mrb[0].mxu0 %v107
  %v254 = vpop.f32.mrb[0].mxu0
  %v255 = vadd.f32 0.0, %v254
  %v256 = vpop.f32.mrb[0].mxu0
  %v257 = vpop.f32.mrb[0].mxu0
  %v258 = vadd.f32 0.0, %v257
  %v259 = vpop.f32.mrb[0].mxu0
  %260 = vdwg.mxu0
  %v261 = vld [vmem:[%s3] sm:$0xff]
  %v262 = vld [vmem:[%s3 + $0x8] sm:$0xff]
  %v263 = vld [vmem:[%s3 + $0x10] sm:$0xff]
  %v264 = vld [vmem:[%s3 + $0x18] sm:$0xff]
  %v265 = vld [vmem:[%s3 + $0x20] sm:$0xff]
  %v266 = vld [vmem:[%s3 + $0x28] sm:$0xff]
  %v267 = vld [vmem:[%s3 + $0x30] sm:$0xff]
  %v268 = vld [vmem:[%s3 + $0x38] sm:$0xff]
  %v269 = vld [vmem:[%s3 + $0x40] sm:$0xff]
  %v270 = vld [vmem:[%s3 + $0x48] sm:$0xff]
  %v271 = vld [vmem:[%s3 + $0x50] sm:$0xff]
  %v272 = vld [vmem:[%s3 + $0x58] sm:$0xff]
  %v273 = vld [vmem:[%s3 + $0x60] sm:$0xff]
  %v274 = vld [vmem:[%s3 + $0x68] sm:$0xff]
  %v275 = vld [vmem:[%s3 + $0x70] sm:$0xff]
  %v276 = vld [vmem:[%s3 + $0x78] sm:$0xff]
  %277 = vmatprep.subr.mxu0 0.0
  %278 = vmatpush1.msra.mxu0 %v261
  %279 = vmatprep.subr.mxu0 0.0
  %280 = vmatpush1.msra.mxu0 %v262
  %281 = vmatprep.subr.mxu0 0.0
  %282 = vmatpush1.msra.mxu0 %v263
  %283 = vmatprep.subr.mxu0 0.0
  %284 = vmatpush1.msra.mxu0 %v264
  %285 = vmatprep.subr.mxu0 0.0
  %286 = vmatpush1.msra.mxu0 %v265
  %287 = vmatprep.subr.mxu0 0.0
  %288 = vmatpush1.msra.mxu0 %v266
  %289 = vmatprep.subr.mxu0 0.0
  %290 = vmatpush1.msra.mxu0 %v267
  %291 = vmatprep.subr.mxu0 0.0
  %292 = vmatpush1.msra.mxu0 %v268
  %293 = vmatprep.subr.mxu0 0.0
  %294 = vmatpush1.msra.mxu0 %v269
  %295 = vmatprep.subr.mxu0 0.0
  %296 = vmatpush1.msra.mxu0 %v270
  %297 = vmatprep.subr.mxu0 0.0
  %298 = vmatpush1.msra.mxu0 %v271
  %299 = vmatprep.subr.mxu0 0.0
  %300 = vmatpush1.msra.mxu0 %v272
  %301 = vmatprep.subr.mxu0 0.0
  %302 = vmatpush1.msra.mxu0 %v273
  %303 = vmatprep.subr.mxu0 0.0
  %304 = vmatpush1.msra.mxu0 %v274
  %305 = vmatprep.subr.mxu0 0.0
  %306 = vmatpush1.msra.mxu0 %v275
  %307 = vmatprep.subr.mxu0 0.0
  %308 = vmatpush1.msra.mxu0 %v276
  %309 = vmatprep.subr.mxu0 0.0
  %310 = vmatpush1.msra.mxu0 0.0
  %311 = vmatprep.subr.mxu0 0.0
  %312 = vmatpush1.msra.mxu0 0.0
  %313 = vmatprep.subr.mxu0 0.0
  %314 = vmatpush1.msra.mxu0 0.0
  %315 = vmatprep.subr.mxu0 0.0
  %316 = vmatpush1.msra.mxu0 0.0
  %317 = vmatprep.subr.mxu0 0.0
  %318 = vmatpush1.msra.mxu0 0.0
  %319 = vmatprep.subr.mxu0 0.0
  %320 = vmatpush1.msra.mxu0 0.0
  %321 = vmatprep.subr.mxu0 0.0
  %322 = vmatpush1.msra.mxu0 0.0
  %323 = vmatprep.subr.mxu0 0.0
  %324 = vmatpush1.msra.mxu0 0.0
  %325 = vmatprep.subr.mxu0 0.0
  %326 = vmatpush1.msra.mxu0 0.0
  %327 = vmatprep.subr.mxu0 0.0
  %328 = vmatpush1.msra.mxu0 0.0
  %329 = vmatprep.subr.mxu0 0.0
  %330 = vmatpush1.msra.mxu0 0.0
  %331 = vmatprep.subr.mxu0 0.0
  %332 = vmatpush1.msra.mxu0 0.0
  %333 = vmatprep.subr.mxu0 0.0
  %334 = vmatpush1.msra.mxu0 0.0
  %335 = vmatprep.subr.mxu0 0.0
  %336 = vmatpush1.msra.mxu0 0.0
  %337 = vmatprep.subr.mxu0 0.0
  %338 = vmatpush1.msra.mxu0 0.0
  %339 = vmatprep.subr.mxu0 0.0
  %340 = vmatpush1.msra.mxu0 0.0
  %341 = vmatprep.mubr.f32.mxu0 0.0
  %342 = vmatmul.mubr.f32.gmra.mrb[0].mxu0 %v199
  %v343 = vpop.f32.mrb[0].mxu0
  %v344 = vadd.f32 0.0, %v343
  %v345 = vpop.f32.mrb[0].mxu0
  %346 = vmatprep.mubr.f32.mxu0 0.0
  %347 = vmatmul.mubr.f32.gmra.mrb[0].mxu0 %v202
  %v348 = vpop.f32.mrb[0].mxu0
  %v349 = vadd.f32 0.0, %v348
  %v350 = vpop.f32.mrb[0].mxu0
  %351 = vmatprep.mubr.f32.mxu0 0.0
  %352 = vmatmul.mubr.f32.gmra.mrb[0].mxu0 %v207
  %v353 = vpop.f32.mrb[0].mxu0
  %v354 = vadd.f32 0.0, %v353
  %v355 = vpop.f32.mrb[0].mxu0
  %356 = vmatprep.mubr.f32.mxu0 0.0
  %357 = vmatmul.mubr.f32.gmra.mrb[0].mxu0 %v210
  %v358 = vpop.f32.mrb[0].mxu0
  %v359 = vadd.f32 0.0, %v358
  %v360 = vpop.f32.mrb[0].mxu0
  %361 = vmatprep.mubr.f32.mxu0 0.0
  %362 = vmatmul.mubr.f32.gmra.mrb[0].mxu0 %v215
  %v363 = vpop.f32.mrb[0].mxu0
  %v364 = vadd.f32 0.0, %v363
  %v365 = vpop.f32.mrb[0].mxu0
  %366 = vmatprep.mubr.f32.mxu0 0.0
  %367 = vmatmul.mubr.f32.gmra.mrb[0].mxu0 %v218
  %v368 = vpop.f32.mrb[0].mxu0
  %v369 = vadd.f32 0.0, %v368
  %v370 = vpop.f32.mrb[0].mxu0
  %371 = vmatprep.mubr.f32.mxu0 0.0
  %372 = vmatmul.mubr.f32.gmra.mrb[0].mxu0 %v223
  %v373 = vpop.f32.mrb[0].mxu0
  %v374 = vadd.f32 0.0, %v373
  %v375 = vpop.f32.mrb[0].mxu0
  %376 = vmatprep.mubr.f32.mxu0 0.0
  %377 = vmatmul.mubr.f32.gmra.mrb[0].mxu0 %v226
  %v378 = vpop.f32.mrb[0].mxu0
  %v379 = vadd.f32 0.0, %v378
  %v380 = vpop.f32.mrb[0].mxu0
  %381 = vmatprep.mubr.f32.mxu0 0.0
  %382 = vmatmul.mubr.f32.gmra.mrb[0].mxu0 %v231
  %v383 = vpop.f32.mrb[0].mxu0
  %v384 = vadd.f32 0.0, %v383
  %v385 = vpop.f32.mrb[0].mxu0
  %386 = vmatprep.mubr.f32.mxu0 0.0
  %387 = vmatmul.mubr.f32.gmra.mrb[0].mxu0 %v234
  %v388 = vpop.f32.mrb[0].mxu0
  %v389 = vadd.f32 0.0, %v388
  %v390 = vpop.f32.mrb[0].mxu0
  %391 = vmatprep.mubr.f32.mxu0 0.0
  %392 = vmatmul.mubr.f32.gmra.mrb[0].mxu0 %v239
  %v393 = vpop.f32.mrb[0].mxu0
  %v394 = vadd.f32 0.0, %v393
  %v395 = vpop.f32.mrb[0].mxu0
  %396 = vmatprep.mubr.f32.mxu0 0.0
  %397 = vmatmul.mubr.f32.gmra.mrb[0].mxu0 %v242
  %v398 = vpop.f32.mrb[0].mxu0
  %v399 = vadd.f32 0.0, %v398
  %v400 = vpop.f32.mrb[0].mxu0
  %401 = vmatprep.mubr.f32.mxu0 0.0
  %402 = vmatmul.mubr.f32.gmra.mrb[0].mxu0 %v247
  %v403 = vpop.f32.mrb[0].mxu0
  %v404 = vadd.f32 0.0, %v403
  %v405 = vpop.f32.mrb[0].mxu0
  %406 = vmatprep.mubr.f32.mxu0 0.0
  %407 = vmatmul.mubr.f32.gmra.mrb[0].mxu0 %v250
  %v408 = vpop.f32.mrb[0].mxu0
  %v409 = vadd.f32 0.0, %v408
  %v410 = vpop.f32.mrb[0].mxu0
  %411 = vmatprep.mubr.f32.mxu0 0.0
  %412 = vmatmul.mubr.f32.gmra.mrb[0].mxu0 %v255
  %v413 = vpop.f32.mrb[0].mxu0
  %v414 = vadd.f32 0.0, %v413
  %v415 = vpop.f32.mrb[0].mxu0
  %416 = vmatprep.mubr.f32.mxu0 0.0
  %417 = vmatmul.mubr.f32.gmra.mrb[0].mxu0 %v258
  %v418 = vpop.f32.mrb[0].mxu0
  %v419 = vadd.f32 0.0, %v418
  %v420 = vpop.f32.mrb[0].mxu0
  %421 = vdwg.mxu0
  %v422 = vld [vmem:[%s2] sm:$0xf]
  %v423 = vld [vmem:[%s2 + $0x4] sm:$0xf]
  %v424 = vld [vmem:[%s2 + $0x8] sm:$0xf]
  %v425 = vld [vmem:[%s2 + $0xc] sm:$0xf]
  %v426 = vld [vmem:[%s2 + $0x10] sm:$0xf]
  %v427 = vld [vmem:[%s2 + $0x14] sm:$0xf]
  %v428 = vld [vmem:[%s2 + $0x18] sm:$0xf]
  %v429 = vld [vmem:[%s2 + $0x1c] sm:$0xf]
  %v430 = vld [vmem:[%s2 + $0x20] sm:$0xf]
  %v431 = vld [vmem:[%s2 + $0x24] sm:$0xf]
  %v432 = vld [vmem:[%s2 + $0x28] sm:$0xf]
  %v433 = vld [vmem:[%s2 + $0x2c] sm:$0xf]
  %v434 = vld [vmem:[%s2 + $0x30] sm:$0xf]
  %v435 = vld [vmem:[%s2 + $0x34] sm:$0xf]
  %v436 = vld [vmem:[%s2 + $0x38] sm:$0xf]
  %v437 = vld [vmem:[%s2 + $0x3c] sm:$0xf]
  %v454 = vunpack.c.l.b16 %v422
  %v455 = vunpack.c.l.b16 %v423
  %v456 = vunpack.c.l.b16 %v424
  %v457 = vunpack.c.l.b16 %v425
  %v458 = vunpack.c.l.b16 %v426
  %v459 = vunpack.c.l.b16 %v427
  %v460 = vunpack.c.l.b16 %v428
  %v461 = vunpack.c.l.b16 %v429
  %v462 = vunpack.c.l.b16 %v430
  %v463 = vunpack.c.l.b16 %v431
  %v464 = vunpack.c.l.b16 %v432
  %v465 = vunpack.c.l.b16 %v433
  %v466 = vunpack.c.l.b16 %v434
  %v467 = vunpack.c.l.b16 %v435
  %v468 = vunpack.c.l.b16 %v436
  %v469 = vunpack.c.l.b16 %v437
  %v470 = vpack.c.b16 %v455, %v454
  %v471 = vpack.c.b16 %v457, %v456
  %v472 = vpack.c.b16 %v459, %v458
  %v473 = vpack.c.b16 %v461, %v460
  %v474 = vpack.c.b16 %v463, %v462
  %v475 = vpack.c.b16 %v465, %v464
  %v476 = vpack.c.b16 %v467, %v466
  %v477 = vpack.c.b16 %v469, %v468
  %486 = vmatprep.subr.bf16.mxu0 0
  %487 = vmatpush1.bf16.msra.mxu0 %v470
  %488 = vmatprep.subr.bf16.mxu0 0
  %489 = vmatpush1.bf16.msra.mxu0 %v471
  %490 = vmatprep.subr.bf16.mxu0 0
  %491 = vmatpush1.bf16.msra.mxu0 %v472
  %492 = vmatprep.subr.bf16.mxu0 0
  %493 = vmatpush1.bf16.msra.mxu0 %v473
  %494 = vmatprep.subr.bf16.mxu0 0
  %495 = vmatpush1.bf16.msra.mxu0 %v474
  %496 = vmatprep.subr.bf16.mxu0 0
  %497 = vmatpush1.bf16.msra.mxu0 %v475
  %498 = vmatprep.subr.bf16.mxu0 0
  %499 = vmatpush1.bf16.msra.mxu0 %v476
  %500 = vmatprep.subr.bf16.mxu0 0
  %501 = vmatpush1.bf16.msra.mxu0 %v477
  %502 = vmatprep.subr.bf16.mxu0 0
  %503 = vmatpush1.bf16.msra.mxu0 0
  %504 = vmatprep.subr.bf16.mxu0 0
  %505 = vmatpush1.bf16.msra.mxu0 0
  %506 = vmatprep.subr.bf16.mxu0 0
  %507 = vmatpush1.bf16.msra.mxu0 0
  %508 = vmatprep.subr.bf16.mxu0 0
  %509 = vmatpush1.bf16.msra.mxu0 0
  %510 = vmatprep.subr.bf16.mxu0 0
  %511 = vmatpush1.bf16.msra.mxu0 0
  %512 = vmatprep.subr.bf16.mxu0 0
  %513 = vmatpush1.bf16.msra.mxu0 0
  %514 = vmatprep.subr.bf16.mxu0 0
  %515 = vmatpush1.bf16.msra.mxu0 0
  %516 = vmatprep.subr.bf16.mxu0 0
  %517 = vmatpush1.bf16.msra.mxu0 0
  %518 = vmatprep.mubr.bf16.mxu0 0
  %519 = vmatmul.mubr.bf16.gmra.mrb[0].mxu0 %v148
  %v520 = vpop.f32.mrb[0].mxu0
  %v521 = vadd.f32 %v344, %v520
  %v522 = vpop.f32.mrb[0].mxu0
  %v523 = vpop.f32.mrb[0].mxu0
  %v524 = vadd.f32 %v349, %v523
  %v525 = vpop.f32.mrb[0].mxu0
  %526 = vmatprep.mubr.bf16.mxu0 0
  %527 = vmatmul.mubr.bf16.gmra.mrb[0].mxu0 %v149
  %v528 = vpop.f32.mrb[0].mxu0
  %v529 = vadd.f32 %v354, %v528
  %v530 = vpop.f32.mrb[0].mxu0
  %v531 = vpop.f32.mrb[0].mxu0
  %v532 = vadd.f32 %v359, %v531
  %v533 = vpop.f32.mrb[0].mxu0
  %534 = vmatprep.mubr.bf16.mxu0 0
  %535 = vmatmul.mubr.bf16.gmra.mrb[0].mxu0 %v150
  %v536 = vpop.f32.mrb[0].mxu0
  %v537 = vadd.f32 %v364, %v536
  %v538 = vpop.f32.mrb[0].mxu0
  %v539 = vpop.f32.mrb[0].mxu0
  %v540 = vadd.f32 %v369, %v539
  %v541 = vpop.f32.mrb[0].mxu0
  %542 = vmatprep.mubr.bf16.mxu0 0
  %543 = vmatmul.mubr.bf16.gmra.mrb[0].mxu0 %v151
  %v544 = vpop.f32.mrb[0].mxu0
  %v545 = vadd.f32 %v374, %v544
  %v546 = vpop.f32.mrb[0].mxu0
  %v547 = vpop.f32.mrb[0].mxu0
  %v548 = vadd.f32 %v379, %v547
  %v549 = vpop.f32.mrb[0].mxu0
  %550 = vmatprep.mubr.bf16.mxu0 0
  %551 = vmatmul.mubr.bf16.gmra.mrb[0].mxu0 %v152
  %v552 = vpop.f32.mrb[0].mxu0
  %v553 = vadd.f32 %v384, %v552
  %v554 = vpop.f32.mrb[0].mxu0
  %v555 = vpop.f32.mrb[0].mxu0
  %v556 = vadd.f32 %v389, %v555
  %v557 = vpop.f32.mrb[0].mxu0
  %558 = vmatprep.mubr.bf16.mxu0 0
  %559 = vmatmul.mubr.bf16.gmra.mrb[0].mxu0 %v153
  %v560 = vpop.f32.mrb[0].mxu0
  %v561 = vadd.f32 %v394, %v560
  %v562 = vpop.f32.mrb[0].mxu0
  %v563 = vpop.f32.mrb[0].mxu0
  %v564 = vadd.f32 %v399, %v563
  %v565 = vpop.f32.mrb[0].mxu0
  %566 = vmatprep.mubr.bf16.mxu0 0
  %567 = vmatmul.mubr.bf16.gmra.mrb[0].mxu0 %v154
  %v568 = vpop.f32.mrb[0].mxu0
  %v569 = vadd.f32 %v404, %v568
  %v570 = vpop.f32.mrb[0].mxu0
  %v571 = vpop.f32.mrb[0].mxu0
  %v572 = vadd.f32 %v409, %v571
  %v573 = vpop.f32.mrb[0].mxu0
  %574 = vmatprep.mubr.bf16.mxu0 0
  %575 = vmatmul.mubr.bf16.gmra.mrb[0].mxu0 %v155
  %v576 = vpop.f32.mrb[0].mxu0
  %v577 = vadd.f32 %v414, %v576
  %v578 = vpop.f32.mrb[0].mxu0
  %v579 = vpop.f32.mrb[0].mxu0
  %v580 = vadd.f32 %v419, %v579
  %v581 = vpop.f32.mrb[0].mxu0
  %582 = vdwg.mxu0
  %v583 = vld [vmem:[%s4] sm:$0x1]
  %v585 = vlaneseq
  %v586 = vshrl.u32 %v585, 7
  %v587 = vsub.s32 0, %v586
  %v588 = vrot.slane %v583, %v587
  %v590 = vadd.f32 %v521, %v588
  %v591 = vadd.f32 %v524, %v588
  %v592 = vadd.f32 %v529, %v588
  %v593 = vadd.f32 %v532, %v588
  %v594 = vadd.f32 %v537, %v588
  %v595 = vadd.f32 %v540, %v588
  %v596 = vadd.f32 %v545, %v588
  %v597 = vadd.f32 %v548, %v588
  %v598 = vadd.f32 %v553, %v588
  %v599 = vadd.f32 %v556, %v588
  %v600 = vadd.f32 %v561, %v588
  %v601 = vadd.f32 %v564, %v588
  %v602 = vadd.f32 %v569, %v588
  %v603 = vadd.f32 %v572, %v588
  %v604 = vadd.f32 %v577, %v588
  %v605 = vadd.f32 %v580, %v588
  %v606 = vmax.f32 %v590, 0.0
  %v607 = vmax.f32 %v591, 0.0
  %v608 = vmax.f32 %v592, 0.0
  %v609 = vmax.f32 %v593, 0.0
  %v610 = vmax.f32 %v594, 0.0
  %v611 = vmax.f32 %v595, 0.0
  %v612 = vmax.f32 %v596, 0.0
  %v613 = vmax.f32 %v597, 0.0
  %v614 = vmax.f32 %v598, 0.0
  %v615 = vmax.f32 %v599, 0.0
  %v616 = vmax.f32 %v600, 0.0
  %v617 = vmax.f32 %v601, 0.0
  %v618 = vmax.f32 %v602, 0.0
  %v619 = vmax.f32 %v603, 0.0
  %v620 = vmax.f32 %v604, 0.0
  %v621 = vmax.f32 %v605, 0.0
  %v622 = vpack.c.bf16 %v607, %v606
  %v623 = vpack.c.bf16 %v609, %v608
  %v624 = vpack.c.bf16 %v611, %v610
  %v625 = vpack.c.bf16 %v613, %v612
  %v626 = vpack.c.bf16 %v615, %v614
  %v627 = vpack.c.bf16 %v617, %v616
  %v628 = vpack.c.bf16 %v619, %v618
  %v629 = vpack.c.bf16 %v621, %v620
  %630 = vmatprep.subr.bf16.mxu0 0
  %631 = vmatpush1.bf16.msra.mxu0 %v622
  %632 = vmatprep.subr.bf16.mxu0 0
  %633 = vmatpush1.bf16.msra.mxu0 %v623
  %634 = vmatprep.subr.bf16.mxu0 0
  %635 = vmatpush1.bf16.msra.mxu0 %v624
  %636 = vmatprep.subr.bf16.mxu0 0
  %637 = vmatpush1.bf16.msra.mxu0 %v625
  %638 = vmatprep.subr.bf16.mxu0 0
  %639 = vmatpush1.bf16.msra.mxu0 %v626
  %640 = vmatprep.subr.bf16.mxu0 0
  %641 = vmatpush1.bf16.msra.mxu0 %v627
  %642 = vmatprep.subr.bf16.mxu0 0
  %643 = vmatpush1.bf16.msra.mxu0 %v628
  %644 = vmatprep.subr.bf16.mxu0 0
  %645 = vmatpush1.bf16.msra.mxu0 %v629
  %646 = vmatprep.subr.bf16.mxu0 0
  %647 = vmatpush1.bf16.msra.mxu0 0
  %648 = vmatprep.subr.bf16.mxu0 0
  %649 = vmatpush1.bf16.msra.mxu0 0
  %650 = vmatprep.subr.bf16.mxu0 0
  %651 = vmatpush1.bf16.msra.mxu0 0
  %652 = vmatprep.subr.bf16.mxu0 0
  %653 = vmatpush1.bf16.msra.mxu0 0
  %654 = vmatprep.subr.bf16.mxu0 0
  %655 = vmatpush1.bf16.msra.mxu0 0
  %656 = vmatprep.subr.bf16.mxu0 0
  %657 = vmatpush1.bf16.msra.mxu0 0
  %658 = vmatprep.subr.bf16.mxu0 0
  %659 = vmatpush1.bf16.msra.mxu0 0
  %660 = vmatprep.subr.bf16.mxu0 0
  %661 = vmatpush1.bf16.msra.mxu0 0
  %662 = vmatprep.mubr.bf16.mxu0 0
  %663 = vmatmul.mubr.bf16.gmra.mrb[0].mxu0 %v100
  %v664 = vpop.f32.mrb[0].mxu0
  %v665 = vadd.f32 0.0, %v664
  %v666 = vpop.f32.mrb[0].mxu0
  %v667 = vpop.f32.mrb[0].mxu0
  %v668 = vadd.f32 0.0, %v667
  %v669 = vpop.f32.mrb[0].mxu0
  %670 = vmatprep.mubr.bf16.mxu0 0
  %671 = vmatmul.mubr.bf16.gmra.mrb[0].mxu0 %v101
  %v672 = vpop.f32.mrb[0].mxu0
  %v673 = vadd.f32 0.0, %v672
  %v674 = vpop.f32.mrb[0].mxu0
  %v675 = vpop.f32.mrb[0].mxu0
  %v676 = vadd.f32 0.0, %v675
  %v677 = vpop.f32.mrb[0].mxu0
  %678 = vmatprep.mubr.bf16.mxu0 0
  %679 = vmatmul.mubr.bf16.gmra.mrb[0].mxu0 %v102
  %v680 = vpop.f32.mrb[0].mxu0
  %v681 = vadd.f32 0.0, %v680
  %v682 = vpop.f32.mrb[0].mxu0
  %v683 = vpop.f32.mrb[0].mxu0
  %v684 = vadd.f32 0.0, %v683
  %v685 = vpop.f32.mrb[0].mxu0
  %686 = vmatprep.mubr.bf16.mxu0 0
  %687 = vmatmul.mubr.bf16.gmra.mrb[0].mxu0 %v103
  %v688 = vpop.f32.mrb[0].mxu0
  %v689 = vadd.f32 0.0, %v688
  %v690 = vpop.f32.mrb[0].mxu0
  %v691 = vpop.f32.mrb[0].mxu0
  %v692 = vadd.f32 0.0, %v691
  %v693 = vpop.f32.mrb[0].mxu0
  %694 = vmatprep.mubr.bf16.mxu0 0
  %695 = vmatmul.mubr.bf16.gmra.mrb[0].mxu0 %v104
  %v696 = vpop.f32.mrb[0].mxu0
  %v697 = vadd.f32 0.0, %v696
  %v698 = vpop.f32.mrb[0].mxu0
  %v699 = vpop.f32.mrb[0].mxu0
  %v700 = vadd.f32 0.0, %v699
  %v701 = vpop.f32.mrb[0].mxu0
  %702 = vmatprep.mubr.bf16.mxu0 0
  %703 = vmatmul.mubr.bf16.gmra.mrb[0].mxu0 %v105
  %v704 = vpop.f32.mrb[0].mxu0
  %v705 = vadd.f32 0.0, %v704
  %v706 = vpop.f32.mrb[0].mxu0
  %v707 = vpop.f32.mrb[0].mxu0
  %v708 = vadd.f32 0.0, %v707
  %v709 = vpop.f32.mrb[0].mxu0
  %710 = vmatprep.mubr.bf16.mxu0 0
  %711 = vmatmul.mubr.bf16.gmra.mrb[0].mxu0 %v106
  %v712 = vpop.f32.mrb[0].mxu0
  %v713 = vadd.f32 0.0, %v712
  %v714 = vpop.f32.mrb[0].mxu0
  %v715 = vpop.f32.mrb[0].mxu0
  %v716 = vadd.f32 0.0, %v715
  %v717 = vpop.f32.mrb[0].mxu0
  %718 = vmatprep.mubr.bf16.mxu0 0
  %719 = vmatmul.mubr.bf16.gmra.mrb[0].mxu0 %v107
  %v720 = vpop.f32.mrb[0].mxu0
  %v721 = vadd.f32 0.0, %v720
  %v722 = vpop.f32.mrb[0].mxu0
  %v723 = vpop.f32.mrb[0].mxu0
  %v724 = vadd.f32 0.0, %v723
  %v725 = vpop.f32.mrb[0].mxu0
  %726 = vdwg.mxu0
  %v727 = vld [vmem:[%s6] sm:$0xff]
  %v728 = vld [vmem:[%s6 + $0x8] sm:$0xff]
  %v729 = vld [vmem:[%s6 + $0x10] sm:$0xff]
  %v730 = vld [vmem:[%s6 + $0x18] sm:$0xff]
  %v731 = vld [vmem:[%s6 + $0x20] sm:$0xff]
  %v732 = vld [vmem:[%s6 + $0x28] sm:$0xff]
  %v733 = vld [vmem:[%s6 + $0x30] sm:$0xff]
  %v734 = vld [vmem:[%s6 + $0x38] sm:$0xff]
  %v735 = vld [vmem:[%s6 + $0x40] sm:$0xff]
  %v736 = vld [vmem:[%s6 + $0x48] sm:$0xff]
  %v737 = vld [vmem:[%s6 + $0x50] sm:$0xff]
  %v738 = vld [vmem:[%s6 + $0x58] sm:$0xff]
  %v739 = vld [vmem:[%s6 + $0x60] sm:$0xff]
  %v740 = vld [vmem:[%s6 + $0x68] sm:$0xff]
  %v741 = vld [vmem:[%s6 + $0x70] sm:$0xff]
  %v742 = vld [vmem:[%s6 + $0x78] sm:$0xff]
  %743 = vmatprep.subr.mxu0 0.0
  %744 = vmatpush1.msra.mxu0 %v727
  %745 = vmatprep.subr.mxu0 0.0
  %746 = vmatpush1.msra.mxu0 %v728
  %747 = vmatprep.subr.mxu0 0.0
  %748 = vmatpush1.msra.mxu0 %v729
  %749 = vmatprep.subr.mxu0 0.0
  %750 = vmatpush1.msra.mxu0 %v730
  %751 = vmatprep.subr.mxu0 0.0
  %752 = vmatpush1.msra.mxu0 %v731
  %753 = vmatprep.subr.mxu0 0.0
  %754 = vmatpush1.msra.mxu0 %v732
  %755 = vmatprep.subr.mxu0 0.0
  %756 = vmatpush1.msra.mxu0 %v733
  %757 = vmatprep.subr.mxu0 0.0
  %758 = vmatpush1.msra.mxu0 %v734
  %759 = vmatprep.subr.mxu0 0.0
  %760 = vmatpush1.msra.mxu0 %v735
  %761 = vmatprep.subr.mxu0 0.0
  %762 = vmatpush1.msra.mxu0 %v736
  %763 = vmatprep.subr.mxu0 0.0
  %764 = vmatpush1.msra.mxu0 %v737
  %765 = vmatprep.subr.mxu0 0.0
  %766 = vmatpush1.msra.mxu0 %v738
  %767 = vmatprep.subr.mxu0 0.0
  %768 = vmatpush1.msra.mxu0 %v739
  %769 = vmatprep.subr.mxu0 0.0
  %770 = vmatpush1.msra.mxu0 %v740
  %771 = vmatprep.subr.mxu0 0.0
  %772 = vmatpush1.msra.mxu0 %v741
  %773 = vmatprep.subr.mxu0 0.0
  %774 = vmatpush1.msra.mxu0 %v742
  %775 = vmatprep.subr.mxu0 0.0
  %776 = vmatpush1.msra.mxu0 0.0
  %777 = vmatprep.subr.mxu0 0.0
  %778 = vmatpush1.msra.mxu0 0.0
  %779 = vmatprep.subr.mxu0 0.0
  %780 = vmatpush1.msra.mxu0 0.0
  %781 = vmatprep.subr.mxu0 0.0
  %782 = vmatpush1.msra.mxu0 0.0
  %783 = vmatprep.subr.mxu0 0.0
  %784 = vmatpush1.msra.mxu0 0.0
  %785 = vmatprep.subr.mxu0 0.0
  %786 = vmatpush1.msra.mxu0 0.0
  %787 = vmatprep.subr.mxu0 0.0
  %788 = vmatpush1.msra.mxu0 0.0
  %789 = vmatprep.subr.mxu0 0.0
  %790 = vmatpush1.msra.mxu0 0.0
  %791 = vmatprep.subr.mxu0 0.0
  %792 = vmatpush1.msra.mxu0 0.0
  %793 = vmatprep.subr.mxu0 0.0
  %794 = vmatpush1.msra.mxu0 0.0
  %795 = vmatprep.subr.mxu0 0.0
  %796 = vmatpush1.msra.mxu0 0.0
  %797 = vmatprep.subr.mxu0 0.0
  %798 = vmatpush1.msra.mxu0 0.0
  %799 = vmatprep.subr.mxu0 0.0
  %800 = vmatpush1.msra.mxu0 0.0
  %801 = vmatprep.subr.mxu0 0.0
  %802 = vmatpush1.msra.mxu0 0.0
  %803 = vmatprep.subr.mxu0 0.0
  %804 = vmatpush1.msra.mxu0 0.0
  %805 = vmatprep.subr.mxu0 0.0
  %806 = vmatpush1.msra.mxu0 0.0
  %807 = vmatprep.mubr.f32.mxu0 0.0
  %808 = vmatmul.mubr.f32.gmra.mrb[0].mxu0 %v665
  %v809 = vpop.f32.mrb[0].mxu0
  %v810 = vadd.f32 0.0, %v809
  %v811 = vpop.f32.mrb[0].mxu0
  %812 = vmatprep.mubr.f32.mxu0 0.0
  %813 = vmatmul.mubr.f32.gmra.mrb[0].mxu0 %v668
  %v814 = vpop.f32.mrb[0].mxu0
  %v815 = vadd.f32 0.0, %v814
  %v816 = vpop.f32.mrb[0].mxu0
  %817 = vmatprep.mubr.f32.mxu0 0.0
  %818 = vmatmul.mubr.f32.gmra.mrb[0].mxu0 %v673
  %v819 = vpop.f32.mrb[0].mxu0
  %v820 = vadd.f32 0.0, %v819
  %v821 = vpop.f32.mrb[0].mxu0
  %822 = vmatprep.mubr.f32.mxu0 0.0
  %823 = vmatmul.mubr.f32.gmra.mrb[0].mxu0 %v676
  %v824 = vpop.f32.mrb[0].mxu0
  %v825 = vadd.f32 0.0, %v824
  %v826 = vpop.f32.mrb[0].mxu0
  %827 = vmatprep.mubr.f32.mxu0 0.0
  %828 = vmatmul.mubr.f32.gmra.mrb[0].mxu0 %v681
  %v829 = vpop.f32.mrb[0].mxu0
  %v830 = vadd.f32 0.0, %v829
  %v831 = vpop.f32.mrb[0].mxu0
  %832 = vmatprep.mubr.f32.mxu0 0.0
  %833 = vmatmul.mubr.f32.gmra.mrb[0].mxu0 %v684
  %v834 = vpop.f32.mrb[0].mxu0
  %v835 = vadd.f32 0.0, %v834
  %v836 = vpop.f32.mrb[0].mxu0
  %837 = vmatprep.mubr.f32.mxu0 0.0
  %838 = vmatmul.mubr.f32.gmra.mrb[0].mxu0 %v689
  %v839 = vpop.f32.mrb[0].mxu0
  %v840 = vadd.f32 0.0, %v839
  %v841 = vpop.f32.mrb[0].mxu0
  %842 = vmatprep.mubr.f32.mxu0 0.0
  %843 = vmatmul.mubr.f32.gmra.mrb[0].mxu0 %v692
  %v844 = vpop.f32.mrb[0].mxu0
  %v845 = vadd.f32 0.0, %v844
  %v846 = vpop.f32.mrb[0].mxu0
  %847 = vmatprep.mubr.f32.mxu0 0.0
  %848 = vmatmul.mubr.f32.gmra.mrb[0].mxu0 %v697
  %v849 = vpop.f32.mrb[0].mxu0
  %v850 = vadd.f32 0.0, %v849
  %v851 = vpop.f32.mrb[0].mxu0
  %852 = vmatprep.mubr.f32.mxu0 0.0
  %853 = vmatmul.mubr.f32.gmra.mrb[0].mxu0 %v700
  %v854 = vpop.f32.mrb[0].mxu0
  %v855 = vadd.f32 0.0, %v854
  %v856 = vpop.f32.mrb[0].mxu0
  %857 = vmatprep.mubr.f32.mxu0 0.0
  %858 = vmatmul.mubr.f32.gmra.mrb[0].mxu0 %v705
  %v859 = vpop.f32.mrb[0].mxu0
  %v860 = vadd.f32 0.0, %v859
  %v861 = vpop.f32.mrb[0].mxu0
  %862 = vmatprep.mubr.f32.mxu0 0.0
  %863 = vmatmul.mubr.f32.gmra.mrb[0].mxu0 %v708
  %v864 = vpop.f32.mrb[0].mxu0
  %v865 = vadd.f32 0.0, %v864
  %v866 = vpop.f32.mrb[0].mxu0
  %867 = vmatprep.mubr.f32.mxu0 0.0
  %868 = vmatmul.mubr.f32.gmra.mrb[0].mxu0 %v713
  %v869 = vpop.f32.mrb[0].mxu0
  %v870 = vadd.f32 0.0, %v869
  %v871 = vpop.f32.mrb[0].mxu0
  %872 = vmatprep.mubr.f32.mxu0 0.0
  %873 = vmatmul.mubr.f32.gmra.mrb[0].mxu0 %v716
  %v874 = vpop.f32.mrb[0].mxu0
  %v875 = vadd.f32 0.0, %v874
  %v876 = vpop.f32.mrb[0].mxu0
  %877 = vmatprep.mubr.f32.mxu0 0.0
  %878 = vmatmul.mubr.f32.gmra.mrb[0].mxu0 %v721
  %v879 = vpop.f32.mrb[0].mxu0
  %v880 = vadd.f32 0.0, %v879
  %v881 = vpop.f32.mrb[0].mxu0
  %882 = vmatprep.mubr.f32.mxu0 0.0
  %883 = vmatmul.mubr.f32.gmra.mrb[0].mxu0 %v724
  %v884 = vpop.f32.mrb[0].mxu0
  %v885 = vadd.f32 0.0, %v884
  %v886 = vpop.f32.mrb[0].mxu0
  %887 = vdwg.mxu0
  %v888 = vld [vmem:[%s5] sm:$0xf]
  %v889 = vld [vmem:[%s5 + $0x4] sm:$0xf]
  %v890 = vld [vmem:[%s5 + $0x8] sm:$0xf]
  %v891 = vld [vmem:[%s5 + $0xc] sm:$0xf]
  %v892 = vld [vmem:[%s5 + $0x10] sm:$0xf]
  %v893 = vld [vmem:[%s5 + $0x14] sm:$0xf]
  %v894 = vld [vmem:[%s5 + $0x18] sm:$0xf]
  %v895 = vld [vmem:[%s5 + $0x1c] sm:$0xf]
  %v896 = vld [vmem:[%s5 + $0x20] sm:$0xf]
  %v897 = vld [vmem:[%s5 + $0x24] sm:$0xf]
  %v898 = vld [vmem:[%s5 + $0x28] sm:$0xf]
  %v899 = vld [vmem:[%s5 + $0x2c] sm:$0xf]
  %v900 = vld [vmem:[%s5 + $0x30] sm:$0xf]
  %v901 = vld [vmem:[%s5 + $0x34] sm:$0xf]
  %v902 = vld [vmem:[%s5 + $0x38] sm:$0xf]
  %v903 = vld [vmem:[%s5 + $0x3c] sm:$0xf]
  %v920 = vunpack.c.l.b16 %v888
  %v921 = vunpack.c.l.b16 %v889
  %v922 = vunpack.c.l.b16 %v890
  %v923 = vunpack.c.l.b16 %v891
  %v924 = vunpack.c.l.b16 %v892
  %v925 = vunpack.c.l.b16 %v893
  %v926 = vunpack.c.l.b16 %v894
  %v927 = vunpack.c.l.b16 %v895
  %v928 = vunpack.c.l.b16 %v896
  %v929 = vunpack.c.l.b16 %v897
  %v930 = vunpack.c.l.b16 %v898
  %v931 = vunpack.c.l.b16 %v899
  %v932 = vunpack.c.l.b16 %v900
  %v933 = vunpack.c.l.b16 %v901
  %v934 = vunpack.c.l.b16 %v902
  %v935 = vunpack.c.l.b16 %v903
  %v936 = vpack.c.b16 %v921, %v920
  %v937 = vpack.c.b16 %v923, %v922
  %v938 = vpack.c.b16 %v925, %v924
  %v939 = vpack.c.b16 %v927, %v926
  %v940 = vpack.c.b16 %v929, %v928
  %v941 = vpack.c.b16 %v931, %v930
  %v942 = vpack.c.b16 %v933, %v932
  %v943 = vpack.c.b16 %v935, %v934
  %952 = vmatprep.subr.bf16.mxu0 0
  %953 = vmatpush1.bf16.msra.mxu0 %v936
  %954 = vmatprep.subr.bf16.mxu0 0
  %955 = vmatpush1.bf16.msra.mxu0 %v937
  %956 = vmatprep.subr.bf16.mxu0 0
  %957 = vmatpush1.bf16.msra.mxu0 %v938
  %958 = vmatprep.subr.bf16.mxu0 0
  %959 = vmatpush1.bf16.msra.mxu0 %v939
  %960 = vmatprep.subr.bf16.mxu0 0
  %961 = vmatpush1.bf16.msra.mxu0 %v940
  %962 = vmatprep.subr.bf16.mxu0 0
  %963 = vmatpush1.bf16.msra.mxu0 %v941
  %964 = vmatprep.subr.bf16.mxu0 0
  %965 = vmatpush1.bf16.msra.mxu0 %v942
  %966 = vmatprep.subr.bf16.mxu0 0
  %967 = vmatpush1.bf16.msra.mxu0 %v943
  %968 = vmatprep.subr.bf16.mxu0 0
  %969 = vmatpush1.bf16.msra.mxu0 0
  %970 = vmatprep.subr.bf16.mxu0 0
  %971 = vmatpush1.bf16.msra.mxu0 0
  %972 = vmatprep.subr.bf16.mxu0 0
  %973 = vmatpush1.bf16.msra.mxu0 0
  %974 = vmatprep.subr.bf16.mxu0 0
  %975 = vmatpush1.bf16.msra.mxu0 0
  %976 = vmatprep.subr.bf16.mxu0 0
  %977 = vmatpush1.bf16.msra.mxu0 0
  %978 = vmatprep.subr.bf16.mxu0 0
  %979 = vmatpush1.bf16.msra.mxu0 0
  %980 = vmatprep.subr.bf16.mxu0 0
  %981 = vmatpush1.bf16.msra.mxu0 0
  %982 = vmatprep.subr.bf16.mxu0 0
  %983 = vmatpush1.bf16.msra.mxu0 0
  %984 = vmatprep.mubr.bf16.mxu0 0
  %985 = vmatmul.mubr.bf16.gmra.mrb[0].mxu0 %v622
  %v986 = vpop.f32.mrb[0].mxu0
  %v987 = vadd.f32 %v810, %v986
  %v988 = vpop.f32.mrb[0].mxu0
  %v989 = vpop.f32.mrb[0].mxu0
  %v990 = vadd.f32 %v815, %v989
  %v991 = vpop.f32.mrb[0].mxu0
  %992 = vmatprep.mubr.bf16.mxu0 0
  %993 = vmatmul.mubr.bf16.gmra.mrb[0].mxu0 %v623
  %v994 = vpop.f32.mrb[0].mxu0
  %v995 = vadd.f32 %v820, %v994
  %v996 = vpop.f32.mrb[0].mxu0
  %v997 = vpop.f32.mrb[0].mxu0
  %v998 = vadd.f32 %v825, %v997
  %v999 = vpop.f32.mrb[0].mxu0
  %1000 = vmatprep.mubr.bf16.mxu0 0
  %1001 = vmatmul.mubr.bf16.gmra.mrb[0].mxu0 %v624
  %v1002 = vpop.f32.mrb[0].mxu0
  %v1003 = vadd.f32 %v830, %v1002
  %v1004 = vpop.f32.mrb[0].mxu0
  %v1005 = vpop.f32.mrb[0].mxu0
  %v1006 = vadd.f32 %v835, %v1005
  %v1007 = vpop.f32.mrb[0].mxu0
  %1008 = vmatprep.mubr.bf16.mxu0 0
  %1009 = vmatmul.mubr.bf16.gmra.mrb[0].mxu0 %v625
  %v1010 = vpop.f32.mrb[0].mxu0
  %v1011 = vadd.f32 %v840, %v1010
  %v1012 = vpop.f32.mrb[0].mxu0
  %v1013 = vpop.f32.mrb[0].mxu0
  %v1014 = vadd.f32 %v845, %v1013
  %v1015 = vpop.f32.mrb[0].mxu0
  %1016 = vmatprep.mubr.bf16.mxu0 0
  %1017 = vmatmul.mubr.bf16.gmra.mrb[0].mxu0 %v626
  %v1018 = vpop.f32.mrb[0].mxu0
  %v1019 = vadd.f32 %v850, %v1018
  %v1020 = vpop.f32.mrb[0].mxu0
  %v1021 = vpop.f32.mrb[0].mxu0
  %v1022 = vadd.f32 %v855, %v1021
  %v1023 = vpop.f32.mrb[0].mxu0
  %1024 = vmatprep.mubr.bf16.mxu0 0
  %1025 = vmatmul.mubr.bf16.gmra.mrb[0].mxu0 %v627
  %v1026 = vpop.f32.mrb[0].mxu0
  %v1027 = vadd.f32 %v860, %v1026
  %v1028 = vpop.f32.mrb[0].mxu0
  %v1029 = vpop.f32.mrb[0].mxu0
  %v1030 = vadd.f32 %v865, %v1029
  %v1031 = vpop.f32.mrb[0].mxu0
  %1032 = vmatprep.mubr.bf16.mxu0 0
  %1033 = vmatmul.mubr.bf16.gmra.mrb[0].mxu0 %v628
  %v1034 = vpop.f32.mrb[0].mxu0
  %v1035 = vadd.f32 %v870, %v1034
  %v1036 = vpop.f32.mrb[0].mxu0
  %v1037 = vpop.f32.mrb[0].mxu0
  %v1038 = vadd.f32 %v875, %v1037
  %v1039 = vpop.f32.mrb[0].mxu0
  %1040 = vmatprep.mubr.bf16.mxu0 0
  %1041 = vmatmul.mubr.bf16.gmra.mrb[0].mxu0 %v629
  %v1042 = vpop.f32.mrb[0].mxu0
  %v1043 = vadd.f32 %v880, %v1042
  %v1044 = vpop.f32.mrb[0].mxu0
  %v1045 = vpop.f32.mrb[0].mxu0
  %v1046 = vadd.f32 %v885, %v1045
  %v1047 = vpop.f32.mrb[0].mxu0
  %1048 = vdwg.mxu0
  %v1049 = vld [vmem:[%s7] sm:$0x1]
  %v1051 = vlaneseq
  %v1052 = vshrl.u32 %v1051, 7
  %v1053 = vsub.s32 0, %v1052
  %v1054 = vrot.slane %v1049, %v1053
  %v1056 = vadd.f32 %v987, %v1054
  %v1057 = vadd.f32 %v990, %v1054
  %v1058 = vadd.f32 %v995, %v1054
  %v1059 = vadd.f32 %v998, %v1054
  %v1060 = vadd.f32 %v1003, %v1054
  %v1061 = vadd.f32 %v1006, %v1054
  %v1062 = vadd.f32 %v1011, %v1054
  %v1063 = vadd.f32 %v1014, %v1054
  %v1064 = vadd.f32 %v1019, %v1054
  %v1065 = vadd.f32 %v1022, %v1054
  %v1066 = vadd.f32 %v1027, %v1054
  %v1067 = vadd.f32 %v1030, %v1054
  %v1068 = vadd.f32 %v1035, %v1054
  %v1069 = vadd.f32 %v1038, %v1054
  %v1070 = vadd.f32 %v1043, %v1054
  %v1071 = vadd.f32 %v1046, %v1054
  %v1072 = vmax.f32 %v1056, 0.0
  %v1073 = vmax.f32 %v1057, 0.0
  %v1074 = vmax.f32 %v1058, 0.0
  %v1075 = vmax.f32 %v1059, 0.0
  %v1076 = vmax.f32 %v1060, 0.0
  %v1077 = vmax.f32 %v1061, 0.0
  %v1078 = vmax.f32 %v1062, 0.0
  %v1079 = vmax.f32 %v1063, 0.0
  %v1080 = vmax.f32 %v1064, 0.0
  %v1081 = vmax.f32 %v1065, 0.0
  %v1082 = vmax.f32 %v1066, 0.0
  %v1083 = vmax.f32 %v1067, 0.0
  %v1084 = vmax.f32 %v1068, 0.0
  %v1085 = vmax.f32 %v1069, 0.0
  %v1086 = vmax.f32 %v1070, 0.0
  %v1087 = vmax.f32 %v1071, 0.0
  %v1088 = vpack.c.bf16 %v1073, %v1072
  %v1089 = vpack.c.bf16 %v1075, %v1074
  %v1090 = vpack.c.bf16 %v1077, %v1076
  %v1091 = vpack.c.bf16 %v1079, %v1078
  %v1092 = vpack.c.bf16 %v1081, %v1080
  %v1093 = vpack.c.bf16 %v1083, %v1082
  %v1094 = vpack.c.bf16 %v1085, %v1084
  %v1095 = vpack.c.bf16 %v1087, %v1086
  %v1096 = vld [vmem:[%s8] sm:$0xf]
  %v1097 = vld [vmem:[%s8 + $0x4] sm:$0xf]
  %v1098 = vld [vmem:[%s8 + $0x8] sm:$0xf]
  %v1099 = vld [vmem:[%s8 + $0xc] sm:$0xf]
  %v1100 = vld [vmem:[%s8 + $0x10] sm:$0xf]
  %v1101 = vld [vmem:[%s8 + $0x14] sm:$0xf]
  %v1102 = vld [vmem:[%s8 + $0x18] sm:$0xf]
  %v1103 = vld [vmem:[%s8 + $0x1c] sm:$0xf]
  %v1104 = vld [vmem:[%s8 + $0x20] sm:$0xf]
  %v1105 = vld [vmem:[%s8 + $0x24] sm:$0xf]
  %v1106 = vld [vmem:[%s8 + $0x28] sm:$0xf]
  %v1107 = vld [vmem:[%s8 + $0x2c] sm:$0xf]
  %v1108 = vld [vmem:[%s8 + $0x30] sm:$0xf]
  %v1109 = vld [vmem:[%s8 + $0x34] sm:$0xf]
  %v1110 = vld [vmem:[%s8 + $0x38] sm:$0xf]
  %v1111 = vld [vmem:[%s8 + $0x3c] sm:$0xf]
  %v1112 = vld [vmem:[%s9] sm:$0x1]
  %v1114 = vlaneseq
  %v1115 = vshrl.u32 %v1114, 7
  %v1116 = vsub.s32 0, %v1115
  %v1117 = vrot.slane %v1112, %v1116
  %v1135 = vunpack.c.l.b16 %v1096
  %v1136 = vunpack.c.l.b16 %v1097
  %v1137 = vunpack.c.l.b16 %v1098
  %v1138 = vunpack.c.l.b16 %v1099
  %v1139 = vunpack.c.l.b16 %v1100
  %v1140 = vunpack.c.l.b16 %v1101
  %v1141 = vunpack.c.l.b16 %v1102
  %v1142 = vunpack.c.l.b16 %v1103
  %v1143 = vunpack.c.l.b16 %v1104
  %v1144 = vunpack.c.l.b16 %v1105
  %v1145 = vunpack.c.l.b16 %v1106
  %v1146 = vunpack.c.l.b16 %v1107
  %v1147 = vunpack.c.l.b16 %v1108
  %v1148 = vunpack.c.l.b16 %v1109
  %v1149 = vunpack.c.l.b16 %v1110
  %v1150 = vunpack.c.l.b16 %v1111
  %v1151 = vpack.c.b16 %v1136, %v1135
  %v1152 = vpack.c.b16 %v1138, %v1137
  %v1153 = vpack.c.b16 %v1140, %v1139
  %v1154 = vpack.c.b16 %v1142, %v1141
  %v1155 = vpack.c.b16 %v1144, %v1143
  %v1156 = vpack.c.b16 %v1146, %v1145
  %v1157 = vpack.c.b16 %v1148, %v1147
  %v1158 = vpack.c.b16 %v1150, %v1149
  %1167 = vmatprep.subr.bf16.mxu0 0
  %1168 = vmatpush1.bf16.msra.mxu0 %v1151
  %1169 = vmatprep.subr.bf16.mxu0 0
  %1170 = vmatpush1.bf16.msra.mxu0 %v1152
  %1171 = vmatprep.subr.bf16.mxu0 0
  %1172 = vmatpush1.bf16.msra.mxu0 %v1153
  %1173 = vmatprep.subr.bf16.mxu0 0
  %1174 = vmatpush1.bf16.msra.mxu0 %v1154
  %1175 = vmatprep.subr.bf16.mxu0 0
  %1176 = vmatpush1.bf16.msra.mxu0 %v1155
  %1177 = vmatprep.subr.bf16.mxu0 0
  %1178 = vmatpush1.bf16.msra.mxu0 %v1156
  %1179 = vmatprep.subr.bf16.mxu0 0
  %1180 = vmatpush1.bf16.msra.mxu0 %v1157
  %1181 = vmatprep.subr.bf16.mxu0 0
  %1182 = vmatpush1.bf16.msra.mxu0 %v1158
  %1183 = vmatprep.subr.bf16.mxu0 0
  %1184 = vmatpush1.bf16.msra.mxu0 0
  %1185 = vmatprep.subr.bf16.mxu0 0
  %1186 = vmatpush1.bf16.msra.mxu0 0
  %1187 = vmatprep.subr.bf16.mxu0 0
  %1188 = vmatpush1.bf16.msra.mxu0 0
  %1189 = vmatprep.subr.bf16.mxu0 0
  %1190 = vmatpush1.bf16.msra.mxu0 0
  %1191 = vmatprep.subr.bf16.mxu0 0
  %1192 = vmatpush1.bf16.msra.mxu0 0
  %1193 = vmatprep.subr.bf16.mxu0 0
  %1194 = vmatpush1.bf16.msra.mxu0 0
  %1195 = vmatprep.subr.bf16.mxu0 0
  %1196 = vmatpush1.bf16.msra.mxu0 0
  %1197 = vmatprep.subr.bf16.mxu0 0
  %1198 = vmatpush1.bf16.msra.mxu0 0
  %1199 = vmatprep.mubr.bf16.mxu0 0
  %1200 = vmatmul.mubr.bf16.gmra.mrb[0].mxu0 %v1088
  %v1201 = vpop.f32.mrb[0].mxu0
  %v1202 = vadd.f32 %v1117, %v1201
  %v1203 = vpop.f32.mrb[0].mxu0
  %v1204 = vpop.f32.mrb[0].mxu0
  %v1205 = vadd.f32 %v1117, %v1204
  %v1206 = vpop.f32.mrb[0].mxu0
  %1207 = vmatprep.mubr.bf16.mxu0 0
  %1208 = vmatmul.mubr.bf16.gmra.mrb[0].mxu0 %v1089
  %v1209 = vpop.f32.mrb[0].mxu0
  %v1210 = vadd.f32 %v1117, %v1209
  %v1211 = vpop.f32.mrb[0].mxu0
  %v1212 = vpop.f32.mrb[0].mxu0
  %v1213 = vadd.f32 %v1117, %v1212
  %v1214 = vpop.f32.mrb[0].mxu0
  %1215 = vmatprep.mubr.bf16.mxu0 0
  %1216 = vmatmul.mubr.bf16.gmra.mrb[0].mxu0 %v1090
  %v1217 = vpop.f32.mrb[0].mxu0
  %v1218 = vadd.f32 %v1117, %v1217
  %v1219 = vpop.f32.mrb[0].mxu0
  %v1220 = vpop.f32.mrb[0].mxu0
  %v1221 = vadd.f32 %v1117, %v1220
  %v1222 = vpop.f32.mrb[0].mxu0
  %1223 = vmatprep.mubr.bf16.mxu0 0
  %1224 = vmatmul.mubr.bf16.gmra.mrb[0].mxu0 %v1091
  %v1225 = vpop.f32.mrb[0].mxu0
  %v1226 = vadd.f32 %v1117, %v1225
  %v1227 = vpop.f32.mrb[0].mxu0
  %v1228 = vpop.f32.mrb[0].mxu0
  %v1229 = vadd.f32 %v1117, %v1228
  %v1230 = vpop.f32.mrb[0].mxu0
  %1231 = vmatprep.mubr.bf16.mxu0 0
  %1232 = vmatmul.mubr.bf16.gmra.mrb[0].mxu0 %v1092
  %v1233 = vpop.f32.mrb[0].mxu0
  %v1234 = vadd.f32 %v1117, %v1233
  %v1235 = vpop.f32.mrb[0].mxu0
  %v1236 = vpop.f32.mrb[0].mxu0
  %v1237 = vadd.f32 %v1117, %v1236
  %v1238 = vpop.f32.mrb[0].mxu0
  %1239 = vmatprep.mubr.bf16.mxu0 0
  %1240 = vmatmul.mubr.bf16.gmra.mrb[0].mxu0 %v1093
  %v1241 = vpop.f32.mrb[0].mxu0
  %v1242 = vadd.f32 %v1117, %v1241
  %v1243 = vpop.f32.mrb[0].mxu0
  %v1244 = vpop.f32.mrb[0].mxu0
  %v1245 = vadd.f32 %v1117, %v1244
  %v1246 = vpop.f32.mrb[0].mxu0
  %1247 = vmatprep.mubr.bf16.mxu0 0
  %1248 = vmatmul.mubr.bf16.gmra.mrb[0].mxu0 %v1094
  %v1249 = vpop.f32.mrb[0].mxu0
  %v1250 = vadd.f32 %v1117, %v1249
  %v1251 = vpop.f32.mrb[0].mxu0
  %v1252 = vpop.f32.mrb[0].mxu0
  %v1253 = vadd.f32 %v1117, %v1252
  %v1254 = vpop.f32.mrb[0].mxu0
  %1255 = vmatprep.mubr.bf16.mxu0 0
  %1256 = vmatmul.mubr.bf16.gmra.mrb[0].mxu0 %v1095
  %v1257 = vpop.f32.mrb[0].mxu0
  %v1258 = vadd.f32 %v1117, %v1257
  %v1259 = vpop.f32.mrb[0].mxu0
  %v1260 = vpop.f32.mrb[0].mxu0
  %v1261 = vadd.f32 %v1117, %v1260
  %v1262 = vpop.f32.mrb[0].mxu0
  %1263 = vdwg.mxu0
  %1264 = vst [vmem:[%s10] sm:$0xff] %v1202
  %1265 = vst [vmem:[%s10 + $0x8] sm:$0xff] %v1205
  %1266 = vst [vmem:[%s10 + $0x10] sm:$0xff] %v1210
  %1267 = vst [vmem:[%s10 + $0x18] sm:$0xff] %v1213
  %1268 = vst [vmem:[%s10 + $0x20] sm:$0xff] %v1218
  %1269 = vst [vmem:[%s10 + $0x28] sm:$0xff] %v1221
  %1270 = vst [vmem:[%s10 + $0x30] sm:$0xff] %v1226
  %1271 = vst [vmem:[%s10 + $0x38] sm:$0xff] %v1229
  %1272 = vst [vmem:[%s10 + $0x40] sm:$0xff] %v1234
  %1273 = vst [vmem:[%s10 + $0x48] sm:$0xff] %v1237
  %1274 = vst [vmem:[%s10 + $0x50] sm:$0xff] %v1242
  %1275 = vst [vmem:[%s10 + $0x58] sm:$0xff] %v1245
  %1276 = vst [vmem:[%s10 + $0x60] sm:$0xff] %v1250
  %1277 = vst [vmem:[%s10 + $0x68] sm:$0xff] %v1253
  %1278 = vst [vmem:[%s10 + $0x70] sm:$0xff] %v1258
  %1279 = vst [vmem:[%s10 + $0x78] sm:$0xff] %v1261
  // Predicated region
  $region42: #{sage_net_forward.1} parent=0 // pred_check
    _
  $region43: #{sage_net_forward.1} parent=0 // pred_check_branch
    %1281 = sbr.rel (0) target = $region45
  $region44: #{sage_net_forward.1} parent=0 // pred_region
    _
  $region45: #{sage_net_forward.1} parent=0 // pred_fallthru
    _
  // Predicated region
  $region46: #{sage_net_forward.1} parent=0 // pred_check
    _
  $region47: #{sage_net_forward.1} parent=0 // pred_check_branch
    %1283 = sbr.rel (0) target = $region49
  $region48: #{sage_net_forward.1} parent=0 // pred_region
    _
  $region49: #{sage_net_forward.1} parent=0 // pred_fallthru
    _

</llo_original>
